<compile_context>
chip_gen: v7x
topology: tpu7x:2x2x1
jax: 0.10.0
libtpu: 0.0.40
codegen_flags: <defaults>
</compile_context>

<pallas_src>
import math

import jax
import jax.numpy as jnp
from jax.experimental import pallas as pl
from jax.experimental.pallas import tpu as pltpu


def _vmem_capacity_bytes() -> int:
    """Physical VMEM per core; conservative 64 MiB (v7x) fallback."""
    try:
        info = pltpu.get_tpu_info()
        for name in ("vmem_capacity_bytes", "vmem_size_bytes", "vmem_bytes"):
            cap = getattr(info, name, None)
            if cap:
                return int(cap)
    except Exception:
        pass
    return 64 * 1024 * 1024


def _sublane_packing(dtype) -> int:
    # Rows per fully-packed sublane group: 8 for f32, 16 for bf16/f16, 32 for int8/fp8.
    return 8 * max(1, 4 // jnp.dtype(dtype).itemsize)


def _choose_row_tile(rows: int, hidden: int, x_dtype, out_dtype, vmem_cap: int) -> int:
    x_bytes = jnp.dtype(x_dtype).itemsize
    out_bytes = jnp.dtype(out_dtype).itemsize
    packing = max(_sublane_packing(x_dtype), _sublane_packing(out_dtype))
    # Target a ~4 MiB input block: big enough that the ~0.35 us per-grid-step
    # overhead vanishes and the kernel runs near HBM roofline.
    target = max(packing, (4 * 1024 * 1024) // max(1, hidden * x_bytes))
    # Cap so double-buffered (input + output) blocks stay well under VMEM
    # capacity, leaving headroom for weight/bias and compiler scratch.  This is
    # what keeps the same code safe on v7x's 64 MiB as well as v5e/v6e's 128 MiB.
    budget = int(vmem_cap * 0.6)
    cap = max(packing, budget // max(1, 2 * hidden * (x_bytes + out_bytes)))
    tile = min(target, cap)
    tile = max(packing, (tile // packing) * packing)  # keep vregs fully packed
    if tile >= rows:
        # One block covering all rows is always layout-legal (block == full dim).
        return rows
    return tile


def _make_rmsnorm_kernel(eps: float, has_weight: bool, has_bias: bool, w_lowp: bool):
    def kernel(*refs):
        x_ref = refs[0]
        o_ref = refs[-1]
        xf = x_ref[...].astype(jnp.float32)
        # fp32 mean-of-squares over hidden (cross-lane reduce -> XLU slot).
        var = jnp.mean(xf * xf, axis=-1, keepdims=True)
        # rsqrt goes to the EUP slot; the kernel stays HBM-bound either way.
        y = xf * jax.lax.rsqrt(var + jnp.float32(eps))
        if has_weight:
            w = refs[1][...]
            if w_lowp:
                # torch casts to the fp16/bf16 weight dtype *before* multiplying.
                y = y.astype(w.dtype) * w
            else:
                y = y * w.astype(jnp.float32)
            if has_bias:
                y = y + refs[2][...].astype(y.dtype)
        o_ref[...] = y.astype(o_ref.dtype)

    return kernel


def rmsnorm(hidden_states: jax.Array, weight, eps: float, *,
            bias=None, row_tile=None) -> jax.Array:
    """RMSNorm over the last axis.

    hidden_states: (..., hidden); weight: (hidden,) or None; bias: (hidden,) or None.
    Output dtype follows the PyTorch module: fp16/bf16 weight -> weight dtype,
    fp32 weight -> fp32, no weight -> input dtype.

    Note: production shapes should have hidden % 128 == 0 so stores stay
    lane-dense (unmasked vst); small demo shapes still work correctly.
    """
    if bias is not None and weight is None:
        raise ValueError("bias requires weight (elementwise_affine=True)")

    orig_shape = hidden_states.shape
    hidden = orig_shape[-1]
    rows = math.prod(orig_shape[:-1])
    x2d = hidden_states.reshape(rows, hidden)

    has_weight = weight is not None
    has_bias = bias is not None
    if has_weight:
        w_lowp = weight.dtype in (jnp.float16, jnp.bfloat16)
        out_dtype = weight.dtype if w_lowp else jnp.dtype(jnp.float32)
        if has_bias:
            out_dtype = jnp.promote_types(out_dtype, bias.dtype)
    else:
        w_lowp = False
        out_dtype = hidden_states.dtype

    vmem_cap = _vmem_capacity_bytes()
    if row_tile is None:
        row_tile = _choose_row_tile(rows, hidden, hidden_states.dtype, out_dtype, vmem_cap)
    row_tile = min(int(row_tile), rows)
    grid = (pl.cdiv(rows, row_tile),)  # ragged last block handled by Pallas

    in_specs = [pl.BlockSpec((row_tile, hidden), lambda i: (i, 0))]
    inputs = [x2d]
    if has_weight:
        # NOTE: a (1, hidden) block is only legal because it equals the full
        # array shape; never tile the hidden axis of this spec ((8,128) rule).
        in_specs.append(pl.BlockSpec((1, hidden), lambda i: (0, 0)))
        inputs.append(weight.reshape(1, hidden))
        if has_bias:
            in_specs.append(pl.BlockSpec((1, hidden), lambda i: (0, 0)))
            inputs.append(bias.reshape(1, hidden))

    # Raise the default scoped-VMEM limit (16/32 MiB) so the large row tile +
    # double buffering compiles; keep ~25% headroom below physical capacity
    # (64 MiB on v7x, 128 MiB on v5e/v6e).
    vmem_limit = min(int(vmem_cap * 0.75), 100 * 1024 * 1024)

    out2d = pl.pallas_call(
        _make_rmsnorm_kernel(eps, has_weight, has_bias, w_lowp),
        out_shape=jax.ShapeDtypeStruct((rows, hidden), out_dtype),
        grid_spec=pltpu.PrefetchScalarGridSpec(
            num_scalar_prefetch=0,
            grid=grid,
            in_specs=in_specs,
            out_specs=pl.BlockSpec((row_tile, hidden), lambda i: (i, 0)),
        ),
        compiler_params=pltpu.CompilerParams(
            dimension_semantics=("parallel",),  # lets v7x shard rows across its 2 TCs
            vmem_limit_bytes=vmem_limit,
        ),
    )(*inputs)

    return out2d.reshape(orig_shape)


def rmsnorm_ref(x, weight, eps, bias=None):
    """Pure-JAX reference mirroring the PyTorch module's dtype semantics."""
    xf = x.astype(jnp.float32)
    var = jnp.mean(xf * xf, axis=-1, keepdims=True)
    y = xf * jax.lax.rsqrt(var + jnp.float32(eps))
    if weight is not None:
        if weight.dtype in (jnp.float16, jnp.bfloat16):
            y = y.astype(weight.dtype)
        y = y * weight
        if bias is not None:
            y = y + bias
    else:
        y = y.astype(x.dtype)
    return y


if __name__ == "__main__":
    key = jax.random.PRNGKey(0)
    batch, seq, hidden = 2, 8, 32
    eps = 1e-6
    k1, k2 = jax.random.split(key)

    # fp32 input, fp32 weight (module default: elementwise_affine=True, bias=False).
    x = jax.random.normal(k1, (batch, seq, hidden), dtype=jnp.float32)
    weight = jnp.ones((hidden,), dtype=jnp.float32)
    out = jax.block_until_ready(rmsnorm(x, weight, eps))
    ref = rmsnorm_ref(x, weight, eps)
    assert out.shape == x.shape and out.dtype == ref.dtype
    assert jnp.allclose(out, ref, atol=1e-5, rtol=1e-5), "fp32 mismatch vs reference"

    # bf16 input + bf16 weight -> bf16 output (torch casts before the affine mul).
    xb = jax.random.normal(k2, (batch, seq, hidden), dtype=jnp.float32).astype(jnp.bfloat16)
    wb = (1.0 + 0.1 * jax.random.normal(key, (hidden,), dtype=jnp.float32)).astype(jnp.bfloat16)
    outb = jax.block_until_ready(rmsnorm(xb, wb, eps))
    refb = rmsnorm_ref(xb, wb, eps)
    assert outb.dtype == jnp.bfloat16 and outb.dtype == refb.dtype
    assert jnp.allclose(outb.astype(jnp.float32), refb.astype(jnp.float32),
                        atol=3e-2, rtol=3e-2), "bf16 mismatch vs reference"

    print("KERNEL_OK")
</pallas_src>

<mosaic_0001>
module attributes {stable_mosaic.version = 11 : i64} {
  func.func @kernel(%arg0: i32, %arg1: memref<16x32xf32, #tpu.memory_space<vmem>>, %arg2: memref<1x32xf32, #tpu.memory_space<vmem>>, %arg3: memref<16x32xf32, #tpu.memory_space<vmem>>) attributes {dimension_semantics = [#tpu.dimension_semantics<parallel>], iteration_bounds = array<i64: 1>, scalar_prefetch = 0 : i64, scratch_operands = 0 : i64, tpu.core_type = #tpu.core_type<tc>, window_params = [{transform_indices = @transform_0, window_bounds = array<i64: 16, 32>}, {pipeline_mode = #tpu.pipeline_mode<synchronous>, transform_indices = @transform_1, window_bounds = array<i64: 1, 32>}, {transform_indices = @transform_2, window_bounds = array<i64: 16, 32>}]} {
    %c0 = arith.constant 0 : index
    %c0_0 = arith.constant 0 : index
    %0 = vector.load %arg1[%c0, %c0_0] : memref<16x32xf32, #tpu.memory_space<vmem>>, vector<16x32xf32>
    %1 = arith.mulf %0, %0 : vector<16x32xf32>
    %cst = arith.constant dense<0.000000e+00> : vector<16xf32>
    %2 = vector.multi_reduction <add>, %1, %cst [1] : vector<16x32xf32> to vector<16xf32>
    %3 = vector.shape_cast %2 : vector<16xf32> to vector<16x1xf32>
    %cst_1 = arith.constant 3.200000e+01 : f32
    %4 = vector.broadcast %cst_1 : f32 to vector<16x1xf32>
    %5 = arith.divf %3, %4 : vector<16x1xf32>
    %cst_2 = arith.constant 9.99999997E-7 : f32
    %6 = vector.broadcast %cst_2 : f32 to vector<16x1xf32>
    %7 = arith.addf %5, %6 : vector<16x1xf32>
    %8 = math.rsqrt %7 : vector<16x1xf32>
    %9 = vector.broadcast %8 : vector<16x1xf32> to vector<16x32xf32>
    %10 = arith.mulf %0, %9 : vector<16x32xf32>
    %c0_3 = arith.constant 0 : index
    %c0_4 = arith.constant 0 : index
    %11 = vector.load %arg2[%c0_3, %c0_4] : memref<1x32xf32, #tpu.memory_space<vmem>>, vector<1x32xf32>
    %12 = vector.broadcast %11 : vector<1x32xf32> to vector<16x32xf32>
    %13 = arith.mulf %10, %12 : vector<16x32xf32>
    %c0_5 = arith.constant 0 : index
    %c0_6 = arith.constant 0 : index
    %14 = vector.load %arg3[%c0_5, %c0_6] : memref<16x32xf32, #tpu.memory_space<vmem>>, vector<16x32xf32>
    tpu.vector_store %arg3[%c0_5, %c0_6], %13 {strides = array<i32>} : memref<16x32xf32, #tpu.memory_space<vmem>>, vector<16x32xf32>,
    return
  }
  func.func @transform_0(%arg0: i32) -> (i32, i32) {
    %c0_i32 = arith.constant 0 : i32
    %c0_i32_0 = arith.constant 0 : i32
    return %arg0, %c0_i32 : i32, i32
  }
  func.func @transform_1(%arg0: i32) -> (i32, i32) {
    %c0_i32 = arith.constant 0 : i32
    %c0_i32_0 = arith.constant 0 : i32
    %c0_i32_1 = arith.constant 0 : i32
    return %c0_i32, %c0_i32_0 : i32, i32
  }
  func.func @transform_2(%arg0: i32) -> (i32, i32) {
    %c0_i32 = arith.constant 0 : i32
    %c0_i32_0 = arith.constant 0 : i32
    return %arg0, %c0_i32 : i32, i32
  }
}

</mosaic_0001>

<llo_original>
// kernel: tpu_custom_call.1
$region0: #{tpu_custom_call.1}
  #allocation0 [shape = 'u32[]', space=smem, size = 0x4, offset = 0x4, fixed_abs, tag = 'smem constant byte address 0x4 - core index']
  #allocation1 [shape = 'u32[144,128]{1,0:T(1,128)}', space=vmem, size = 0x12000, scoped, tag = 'internal scratch']
  %s0 = inlined_call_operand.hbm [shape: f32[16,32], index: 0, kind: input, shape index: {}]
  %s1 = inlined_call_operand.vmem [shape: f32[1,32], index: 1, kind: input, shape index: {}]
  %s2 = inlined_call_operand.hbm [shape: f32[16,32], index: 2, kind: output, shape index: {}]
  %s3 = sld [smem:[#allocation0]]
  $region22: #{tpu_custom_call.1} parent=0
    _
  %s5 = ssub.s32 1, %s3
  %s6 = scalar_select 0, %s5, %s3
  $region1: #{tpu_custom_call.1} parent=0
    #allocation2 [shape = 'u8[8192]{0}', space=vmem, size = 0x2000, scoped, tag = 'input window, operand 0, single buffered']
    #allocation3 [shape = 's32[1]{0}', space=sflag, size = 0x4, scoped, tag = 'scoped memory for tpu_custom_call.1']
    #allocation4 [shape = 's32[1]{0}', space=sflag, size = 0x4, scoped, tag = 'scoped memory for tpu_custom_call.1']
    #allocation5 [shape = 'u8[8192]{0}', space=vmem, size = 0x2000, scoped, tag = 'output window, operand 0, single buffered']
    %7 = vsyncpa [#allocation3], 0
    %8 = vsyncpa [#allocation4], 0
    // Predicated region
    $region2: #{tpu_custom_call.1} parent=1 // pred_check
      _
    $region3: #{tpu_custom_call.1} parent=1 // pred_check_branch
      %10 = sbr.rel (0) target = $region5
    $region4: #{tpu_custom_call.1} parent=1 // pred_region
      %s12 = ssub.s32 256, 256
      %13 = vsyncadd [#allocation3], %s12
      %s14 = sshll.u32 [#allocation2], 4
      %s15 = int_to_ptr.vmem [resolvable:$true] %s14
      %20 = dma.hbm_to_vmem [thread:$0]  %s0, 256, %s15, [#allocation3], 128, 128, 8
    $region5: #{tpu_custom_call.1} parent=1 // pred_fallthru
      _
    // Predicated region
    $region6: #{tpu_custom_call.1} parent=1 // pred_check
      _
    $region7: #{tpu_custom_call.1} parent=1 // pred_check_branch
      %22 = sbr.rel (0) target = $region9
    $region8: #{tpu_custom_call.1} parent=1 // pred_region
      _
    $region9: #{tpu_custom_call.1} parent=1 // pred_fallthru
      _
    // Predicated region
    $region10: #{tpu_custom_call.1} parent=1 // pred_check
      _
    $region11: #{tpu_custom_call.1} parent=1 // pred_check_branch
      %24 = sbr.rel (0) target = $region13
    $region12: #{tpu_custom_call.1} parent=1 // pred_region
      %25 = dma.done [#allocation3], 256
    $region13: #{tpu_custom_call.1} parent=1 // pred_fallthru
      _
    %v26 = vld [vmem:[#allocation2] sm:$0xff]
    %v27 = vld [vmem:[#allocation2 + $0x8] sm:$0xff]
    %v28 = vmul.f32 %v26, %v26
    %v29 = vmul.f32 %v27, %v27
    %vm30 = vcmask 261120
    %v31 = vsel %vm30, %v28, 0.0
    %32 = vadd.xlane.f32.xlu0 %v31
    %v33 = vpop.xlane.xlu0 %32
    %v34 = vsel %vm30, %v29, 0.0
    %35 = vadd.xlane.f32.xlu0 %v34
    %v36 = vpop.xlane.xlu0 %35
    %v37 = vrcp.pop 32.0
    %v38 = vmul.f32 %v33, %v37
    %v39 = vmul.f32 %v36, %v37
    %v40 = vadd.f32 %v38, 1e-06
    %v41 = vadd.f32 %v39, 1e-06
    %v42 = vrsqrt.pop %v40
    %v43 = vrsqrt.pop %v41
    %v44 = vmul.f32 %v26, %v42
    %v45 = vmul.f32 %v27, %v43
    %v46 = vld [vmem:[%s1] sm:$0x1]
    %v48 = vlaneseq
    %v49 = vshrl.u32 %v48, 7
    %v50 = vsub.s32 0, %v49
    %v51 = vrot.slane %v46, %v50
    %v53 = vmul.f32 %v44, %v51
    %v54 = vmul.f32 %v45, %v51
    %55 = vst.msk [vmem:[#allocation5] sm:$0xff] %vm30, %v53
    %56 = vst.msk [vmem:[#allocation5 + $0x8] sm:$0xff] %vm30, %v54
    // Predicated region
    $region14: #{tpu_custom_call.1} parent=1 // pred_check
      _
    $region15: #{tpu_custom_call.1} parent=1 // pred_check_branch
      %58 = sbr.rel (0) target = $region17
    $region16: #{tpu_custom_call.1} parent=1 // pred_region
      %s60 = ssub.s32 256, 256
      %61 = vsyncadd [#allocation4], %s60
      %s62 = sshll.u32 [#allocation5], 4
      %s63 = int_to_ptr.vmem [resolvable:$true] %s62
      %68 = dma.vmem_to_hbm [thread:$0]  %s63, 256, %s2, [#allocation4], 128, 128, 8
    $region17: #{tpu_custom_call.1} parent=1 // pred_fallthru
      _
    // Predicated region
    $region18: #{tpu_custom_call.1} parent=1 // pred_check
      _
    $region19: #{tpu_custom_call.1} parent=1 // pred_check_branch
      %70 = sbr.rel (0) target = $region21
    $region20: #{tpu_custom_call.1} parent=1 // pred_region
      %71 = dma.done [#allocation4], 256
    $region21: #{tpu_custom_call.1} parent=1 // pred_fallthru
      _
    %72 = vsyncpa [#allocation3], 1
    %73 = vsyncpa [#allocation4], 1

</llo_original>
